<compile_context>
chip_gen: v7x
topology: tpu7x:2x2x1
jax: 0.10.0
libtpu: 0.0.40
codegen_flags: <defaults>
</compile_context>

<pallas_src>
import functools
import math

import jax
import jax.numpy as jnp
from jax import lax
from jax.experimental import pallas as pl
from jax.experimental.pallas import tpu as pltpu


# ---------------------------------------------------------------------------
# Helpers
# ---------------------------------------------------------------------------

def _round_up(x, m):
    return ((x + m - 1) // m) * m


def _divisor_tile(n, preferred):
    """Largest tile <= preferred that is a multiple of 16 and divides n, else n."""
    if n <= preferred:
        return n
    start = preferred - (preferred % 16)
    for t in range(start, 15, -16):
        if n % t == 0:
            return t
    # TODO(synk): pad the sequence instead of falling back to a full-extent tile.
    return n


def _vmem_limit_bytes(*block_bytes):
    """Scoped-VMEM budget: double-buffered blocks + headroom, generation-aware cap."""
    need = 2 * sum(int(b) for b in block_bytes)          # 2 buffers per pipelined block
    need = int(need * 1.3) + (4 << 20)                   # headroom + compiler scratch
    try:
        phys = int(pltpu.get_tpu_info().vmem_capacity_bytes)
    except Exception:
        phys = 64 << 20                                  # conservative (v7x-class)
    cap = min(int(phys * 0.75), 96 << 20)                # ~48 MiB on v7x, ~96 MiB v5e/v6e
    return max(8 << 20, min(need, cap))


# ---------------------------------------------------------------------------
# Pallas kernels
# ---------------------------------------------------------------------------

def _linear_kernel(x_ref, w_ref, b_ref, o_ref):
    # x: (tm, U_in) f32, w: (U_in, U_out) bf16 (pre-transposed), b: (1, U_out) f32.
    y = jnp.dot(x_ref[...].astype(jnp.bfloat16), w_ref[...],
                preferred_element_type=jnp.float32) + b_ref[...]
    o_ref[...] = y.astype(o_ref.dtype)


def _qkv_kernel(x_ref, w_ref, b_ref, q_ref, k_ref, v_ref):
    # Fused Q/K/V projection: one (tm, U) x (U, 3U) bf16 matmul; x is read once.
    y = jnp.dot(x_ref[...].astype(jnp.bfloat16), w_ref[...],
                preferred_element_type=jnp.float32) + b_ref[...]
    u = q_ref.shape[-1]
    q_ref[...] = y[:, :u].astype(q_ref.dtype)
    k_ref[...] = y[:, u:2 * u].astype(k_ref.dtype)
    v_ref[...] = y[:, 2 * u:].astype(v_ref.dtype)


def _attn_outproj_kernel(*refs, n_heads, d_k, has_mask):
    # Flash attention (online softmax over the KV grid axis) with the output
    # projection fused into the last-KV-step epilogue.
    #   q: (tq, U) bf16   k/v: (tk, U) bf16   mask: (tq, tk)
    #   w_out: (U, U) bf16   b_out: (1, U) f32   out: (tq, U) f32
    if has_mask:
        (q_ref, k_ref, v_ref, m_ref, wo_ref, bo_ref, o_ref,
         m_sc, l_sc, acc_sc) = refs
    else:
        (q_ref, k_ref, v_ref, wo_ref, bo_ref, o_ref,
         m_sc, l_sc, acc_sc) = refs
        m_ref = None

    ki = pl.program_id(2)
    tq = q_ref.shape[0]
    u = wo_ref.shape[1]

    @pl.when(ki == 0)
    def _():
        m_sc[...] = jnp.full(m_sc.shape, -jnp.inf, jnp.float32)
        l_sc[...] = jnp.zeros(l_sc.shape, jnp.float32)
        acc_sc[...] = jnp.zeros(acc_sc.shape, jnp.float32)

    if m_ref is not None:
        masked_out = m_ref[...] == 0                   # (tq, tk), loaded once

    # Static unroll over heads (static lane slices; H is small).
    for h in range(n_heads):
        sl = slice(h * d_k, (h + 1) * d_k)
        qh = q_ref[:, sl]                              # (tq, d_k) bf16, scale pre-folded
        kh = k_ref[:, sl]                              # (tk, d_k) bf16
        # "NT" matmul: contract last dims (no in-kernel transpose).
        s = lax.dot_general(qh, kh, (((1,), (1,)), ((), ())),
                            preferred_element_type=jnp.float32)    # (tq, tk) f32
        if m_ref is not None:
            s = jnp.where(masked_out, jnp.float32(-1e9), s)         # masked_fill

        m_prev = m_sc[h]                                             # (tq, 1)
        m_new = jnp.maximum(m_prev, jnp.max(s, axis=-1, keepdims=True))
        alpha = jnp.exp(m_prev - m_new)
        p = jnp.exp(s - m_new)
        l_sc[h] = alpha * l_sc[h] + jnp.sum(p, axis=-1, keepdims=True)
        pv = jnp.dot(p.astype(jnp.bfloat16), v_ref[:, sl],
                     preferred_element_type=jnp.float32)             # (tq, d_k)
        acc_sc[:, sl] = alpha * acc_sc[:, sl] + pv
        m_sc[h] = m_new

    @pl.when(ki == pl.num_programs(2) - 1)
    def _():
        # Fused output projection; exact reciprocal (parity with the PyTorch module).
        y = jnp.zeros((tq, u), jnp.float32)
        for h in range(n_heads):
            sl = slice(h * d_k, (h + 1) * d_k)
            ctx = (acc_sc[:, sl] / l_sc[h]).astype(jnp.bfloat16)     # (tq, d_k)
            y = y + jnp.dot(ctx, wo_ref[sl, :],
                            preferred_element_type=jnp.float32)      # (tq, U)
        o_ref[...] = (y + bo_ref[...]).astype(o_ref.dtype)            # single lane-dense store


# ---------------------------------------------------------------------------
# pallas_call wrappers
# ---------------------------------------------------------------------------

def linear(x2d, w, b, *, tm=256, out_dtype=jnp.float32):
    """PyTorch-style Linear on [M, U_in]; w is pre-transposed (U_in, U_out) bf16."""
    m, u_in = x2d.shape
    u_out = w.shape[1]
    tm = min(tm, _round_up(m, 16))
    grid = (pl.cdiv(m, tm),)   # ragged boundary handled by Pallas (row-independent)

    return pl.pallas_call(
        _linear_kernel,
        grid=grid,
        in_specs=[
            pl.BlockSpec((tm, u_in), lambda i: (i, 0)),
            pl.BlockSpec((u_in, u_out), lambda i: (0, 0)),   # resident weight
            pl.BlockSpec((1, u_out), lambda i: (0, 0)),
        ],
        out_specs=pl.BlockSpec((tm, u_out), lambda i: (i, 0)),
        out_shape=jax.ShapeDtypeStruct((m, u_out), out_dtype),
        compiler_params=pltpu.CompilerParams(
            dimension_semantics=("parallel",),
            vmem_limit_bytes=_vmem_limit_bytes(
                tm * u_in * 4, u_in * u_out * 2, u_out * 4,
                tm * u_out * jnp.dtype(out_dtype).itemsize),
        ),
    )(x2d, w, b.reshape(1, u_out))


def qkv_projection(x2d, w_qkv, b_qkv, *, tm=256):
    """Fused Q/K/V projection: x [M, U] f32 -> (q, k, v), each [M, U] bf16."""
    m, u = x2d.shape
    tm = min(tm, _round_up(m, 16))
    grid = (pl.cdiv(m, tm),)

    out_sds = jax.ShapeDtypeStruct((m, u), jnp.bfloat16)
    return pl.pallas_call(
        _qkv_kernel,
        grid=grid,
        in_specs=[
            pl.BlockSpec((tm, u), lambda i: (i, 0)),
            pl.BlockSpec((u, 3 * u), lambda i: (0, 0)),       # resident fused weight
            pl.BlockSpec((1, 3 * u), lambda i: (0, 0)),
        ],
        out_specs=(
            pl.BlockSpec((tm, u), lambda i: (i, 0)),
            pl.BlockSpec((tm, u), lambda i: (i, 0)),
            pl.BlockSpec((tm, u), lambda i: (i, 0)),
        ),
        out_shape=(out_sds, out_sds, out_sds),
        compiler_params=pltpu.CompilerParams(
            dimension_semantics=("parallel",),
            vmem_limit_bytes=_vmem_limit_bytes(
                tm * u * 4, u * 3 * u * 2, 3 * u * 4, 3 * tm * u * 2),
        ),
    )(x2d, w_qkv, b_qkv.reshape(1, 3 * u))


def attention_outproj(q, k, v, mask, w_out, b_out, n_heads):
    """Flash attention + fused output projection.

    q/k/v: [B, S, H*d_k] bf16 (head-major columns); mask: [B, Sq, Sk] or None;
    w_out: (U, U) bf16 pre-transposed; b_out: (U,) f32.  Returns [B, Sq, U] f32.
    """
    b, sq, u = q.shape
    sk = k.shape[1]
    d_k = u // n_heads
    tq = _divisor_tile(sq, 256)
    tk = _divisor_tile(sk, 512)
    grid = (b, sq // tq, sk // tk)

    kernel = functools.partial(
        _attn_outproj_kernel, n_heads=n_heads, d_k=d_k, has_mask=mask is not None)

    in_specs = [
        pl.BlockSpec((None, tq, u), lambda bi, qi, ki: (bi, qi, 0)),
        pl.BlockSpec((None, tk, u), lambda bi, qi, ki: (bi, ki, 0)),   # KV tiled
        pl.BlockSpec((None, tk, u), lambda bi, qi, ki: (bi, ki, 0)),
    ]
    inputs = [q, k, v]
    vmem_blocks = [tq * u * 2, tk * u * 2, tk * u * 2]
    if mask is not None:
        # Head broadcast done in-kernel; never replicated H x in HBM.
        in_specs.append(pl.BlockSpec((None, tq, tk), lambda bi, qi, ki: (bi, qi, ki)))
        inputs.append(mask)
        vmem_blocks.append(tq * tk * mask.dtype.itemsize)
    in_specs += [
        pl.BlockSpec((u, u), lambda bi, qi, ki: (0, 0)),               # resident W_out
        pl.BlockSpec((1, u), lambda bi, qi, ki: (0, 0)),
    ]
    inputs += [w_out, b_out.reshape(1, u)]
    vmem_blocks += [u * u * 2, u * 4, tq * u * 4,
                    2 * n_heads * tq * 128 * 4 + tq * u * 4]           # scratch (approx)

    return pl.pallas_call(
        kernel,
        grid=grid,
        in_specs=in_specs,
        out_specs=pl.BlockSpec((None, tq, u), lambda bi, qi, ki: (bi, qi, 0)),
        out_shape=jax.ShapeDtypeStruct((b, sq, u), jnp.float32),
        scratch_shapes=[
            pltpu.VMEM((n_heads, tq, 1), jnp.float32),   # running max per head
            pltpu.VMEM((n_heads, tq, 1), jnp.float32),   # running denom per head
            pltpu.VMEM((tq, u), jnp.float32),            # running context accumulator
        ],
        compiler_params=pltpu.CompilerParams(
            dimension_semantics=("parallel", "parallel", "arbitrary"),
            vmem_limit_bytes=_vmem_limit_bytes(*vmem_blocks),
        ),
    )(*inputs)


# ---------------------------------------------------------------------------
# Module equivalent
# ---------------------------------------------------------------------------

class MultiHeadedAttentionPallas:
    """Pallas equivalent of the PyTorch MultiHeadedAttention forward pass."""

    def __init__(self, n_heads, n_units, dropout=0.1, *, key):
        assert n_units % n_heads == 0
        self.n_heads = n_heads
        self.n_units = n_units
        self.d_k = n_units // n_heads
        self.prob_dropout = dropout

        # 4 Linear(n_units, n_units) layers, uniform(-k, k) init with k = 1/sqrt(U).
        k = 1.0 / math.sqrt(n_units)
        keys = jax.random.split(key, 8)
        ws = [jax.random.uniform(keys[2 * i], (n_units, n_units), jnp.float32, -k, k)
              for i in range(4)]
        bs = [jax.random.uniform(keys[2 * i + 1], (n_units,), jnp.float32, -k, k)
              for i in range(4)]

        # Weights stored pre-transposed (U_in, U_out) and in bf16 (MXU-native);
        # W_q|W_k|W_v fused; 1/sqrt(d_k) folded into the Q projection.
        scale = 1.0 / math.sqrt(self.d_k)
        self.w_qkv = jnp.concatenate(
            [ws[0].T * scale, ws[1].T, ws[2].T], axis=1).astype(jnp.bfloat16)  # (U, 3U)
        self.b_qkv = jnp.concatenate([bs[0] * scale, bs[1], bs[2]])            # (3U,) f32
        self.w_out = ws[3].T.astype(jnp.bfloat16)                              # (U, U)
        self.b_out = bs[3]                                                     # (U,) f32

    def __call__(self, query, key_, value, mask=None):
        b, sq, u = query.shape
        sk = key_.shape[1]

        if (query is key_) and (query is value):
            # Self-attention: one fused QKV matmul (activations read once).
            q2d, k2d, v2d = qkv_projection(
                query.reshape(b * sq, u), self.w_qkv, self.b_qkv)
        else:
            # Cross-attention fallback: separate (still tiled, bf16) projections.
            q2d = linear(query.reshape(b * sq, u), self.w_qkv[:, :u],
                         self.b_qkv[:u], out_dtype=jnp.bfloat16)
            k2d = linear(key_.reshape(b * sk, u), self.w_qkv[:, u:2 * u],
                         self.b_qkv[u:2 * u], out_dtype=jnp.bfloat16)
            v2d = linear(value.reshape(b * sk, u), self.w_qkv[:, 2 * u:],
                         self.b_qkv[2 * u:], out_dtype=jnp.bfloat16)

        # Keep the [B, S, H*d_k] layout end-to-end (head split is a column slice in
        # the kernel); attention + output projection fused -> no HBM round trip.
        q = q2d.reshape(b, sq, u)
        k = k2d.reshape(b, sk, u)
        v = v2d.reshape(b, sk, u)
        return attention_outproj(q, k, v, mask, self.w_out, self.b_out, self.n_heads)


# ---------------------------------------------------------------------------
# Pure-JAX reference (sanity check only; same bf16-rounded weights, f32 math)
# ---------------------------------------------------------------------------

def _reference_mha(mha, x, mask):
    b, s, u = x.shape
    h, d_k = mha.n_heads, mha.d_k
    w_qkv = mha.w_qkv.astype(jnp.float32)
    w_out = mha.w_out.astype(jnp.float32)
    q = x @ w_qkv[:, :u] + mha.b_qkv[:u]               # 1/sqrt(d_k) already folded in
    k = x @ w_qkv[:, u:2 * u] + mha.b_qkv[u:2 * u]
    v = x @ w_qkv[:, 2 * u:] + mha.b_qkv[2 * u:]

    def split(t):
        return t.reshape(b, s, h, d_k).transpose(0, 2, 1, 3)

    q, k, v = split(q), split(k), split(v)
    scores = jnp.einsum("bhqd,bhkd->bhqk", q, k)
    if mask is not None:
        scores = jnp.where(mask[:, None, :, :] == 0, -1e9, scores)
    p = jax.nn.softmax(scores, axis=-1)
    ctx = jnp.einsum("bhqk,bhkd->bhqd", p, v)
    ctx = ctx.transpose(0, 2, 1, 3).reshape(b, s, u)
    return ctx @ w_out + mha.b_out


# ---------------------------------------------------------------------------
# Demo
# ---------------------------------------------------------------------------

if __name__ == "__main__":
    B, S, H, U = 2, 8, 4, 32

    root = jax.random.PRNGKey(0)
    k_param, k_x = jax.random.split(root, 2)

    mha = MultiHeadedAttentionPallas(n_heads=H, n_units=U, dropout=0.1, key=k_param)

    # Self-attention input (q = k = v), as used by the transformer LM in the source.
    x = jax.random.normal(k_x, (B, S, U), jnp.float32)

    # Causal mask [B, S, S]: 1 = attend, 0 = masked out (broadcast over heads inside
    # the kernel; never replicated H x in HBM).
    causal = jnp.tril(jnp.ones((S, S), jnp.float32))
    mask = jnp.broadcast_to(causal, (B, S, S))

    out = mha(x, x, x, mask)
    jax.block_until_ready(out)
    assert out.shape == (B, S, U)

    # Loose tolerance: matmul operands are bf16 (f32 accumulation / softmax).
    ref = _reference_mha(mha, x, mask)
    err = float(jnp.max(jnp.abs(out - ref)))
    assert jnp.allclose(out, ref, atol=8e-2, rtol=5e-2), err

    # Also exercise the unmasked path.
    out_nm = mha(x, x, x, None)
    jax.block_until_ready(out_nm)
    ref_nm = _reference_mha(mha, x, None)
    err_nm = float(jnp.max(jnp.abs(out_nm - ref_nm)))
    assert jnp.allclose(out_nm, ref_nm, atol=8e-2, rtol=5e-2), err_nm

    print("KERNEL_OK")
</pallas_src>

<mosaic_0001>
module attributes {stable_mosaic.version = 11 : i64} {
  func.func @_qkv_kernel(%arg0: i32, %arg1: memref<16x32xf32, #tpu.memory_space<vmem>>, %arg2: memref<32x96xbf16, #tpu.memory_space<vmem>>, %arg3: memref<1x96xf32, #tpu.memory_space<vmem>>, %arg4: memref<16x32xbf16, #tpu.memory_space<vmem>>, %arg5: memref<16x32xbf16, #tpu.memory_space<vmem>>, %arg6: memref<16x32xbf16, #tpu.memory_space<vmem>>) attributes {dimension_semantics = [#tpu.dimension_semantics<parallel>], iteration_bounds = array<i64: 1>, scalar_prefetch = 0 : i64, scratch_operands = 0 : i64, tpu.core_type = #tpu.core_type<tc>, window_params = [{transform_indices = @transform_0, window_bounds = array<i64: 16, 32>}, {pipeline_mode = #tpu.pipeline_mode<synchronous>, transform_indices = @transform_1, window_bounds = array<i64: 32, 96>}, {pipeline_mode = #tpu.pipeline_mode<synchronous>, transform_indices = @transform_2, window_bounds = array<i64: 1, 96>}, {transform_indices = @transform_3, window_bounds = array<i64: 16, 32>}, {transform_indices = @transform_4, window_bounds = array<i64: 16, 32>}, {transform_indices = @transform_5, window_bounds = array<i64: 16, 32>}]} {
    %c0 = arith.constant 0 : index
    %c0_0 = arith.constant 0 : index
    %0 = vector.load %arg1[%c0, %c0_0] : memref<16x32xf32, #tpu.memory_space<vmem>>, vector<16x32xf32>
    %1 = arith.truncf %0 : vector<16x32xf32> to vector<16x32xbf16>
    %c0_1 = arith.constant 0 : index
    %c0_2 = arith.constant 0 : index
    %2 = vector.load %arg2[%c0_1, %c0_2] : memref<32x96xbf16, #tpu.memory_space<vmem>>, vector<32x96xbf16>
    %cst = arith.constant dense<0.000000e+00> : vector<16x96xf32>
    %3 = tpu.matmul %1, %2, %cst {dimension_numbers = #tpu.dot_dimension_numbers<[1], [0], [0], [1], [0, 0, 1, 1], [], []>} : vector<16x32xbf16>, vector<32x96xbf16>, vector<16x96xf32> -> vector<16x96xf32>
    %c0_3 = arith.constant 0 : index
    %c0_4 = arith.constant 0 : index
    %4 = vector.load %arg3[%c0_3, %c0_4] : memref<1x96xf32, #tpu.memory_space<vmem>>, vector<1x96xf32>
    %5 = vector.broadcast %4 : vector<1x96xf32> to vector<16x96xf32>
    %6 = arith.addf %3, %5 : vector<16x96xf32>
    %7 = vector.extract_strided_slice %6 {offsets = [0, 0], sizes = [16, 32], strides = [1, 1]} : vector<16x96xf32> to vector<16x32xf32>
    %8 = arith.truncf %7 : vector<16x32xf32> to vector<16x32xbf16>
    %c0_5 = arith.constant 0 : index
    %c0_6 = arith.constant 0 : index
    %9 = vector.load %arg4[%c0_5, %c0_6] : memref<16x32xbf16, #tpu.memory_space<vmem>>, vector<16x32xbf16>
    tpu.vector_store %arg4[%c0_5, %c0_6], %8 {strides = array<i32>} : memref<16x32xbf16, #tpu.memory_space<vmem>>, vector<16x32xbf16>,
    %10 = vector.extract_strided_slice %6 {offsets = [0, 32], sizes = [16, 32], strides = [1, 1]} : vector<16x96xf32> to vector<16x32xf32>
    %11 = arith.truncf %10 : vector<16x32xf32> to vector<16x32xbf16>
    %c0_7 = arith.constant 0 : index
    %c0_8 = arith.constant 0 : index
    %12 = vector.load %arg5[%c0_7, %c0_8] : memref<16x32xbf16, #tpu.memory_space<vmem>>, vector<16x32xbf16>
    tpu.vector_store %arg5[%c0_7, %c0_8], %11 {strides = array<i32>} : memref<16x32xbf16, #tpu.memory_space<vmem>>, vector<16x32xbf16>,
    %13 = vector.extract_strided_slice %6 {offsets = [0, 64], sizes = [16, 32], strides = [1, 1]} : vector<16x96xf32> to vector<16x32xf32>
    %14 = arith.truncf %13 : vector<16x32xf32> to vector<16x32xbf16>
    %c0_9 = arith.constant 0 : index
    %c0_10 = arith.constant 0 : index
    %15 = vector.load %arg6[%c0_9, %c0_10] : memref<16x32xbf16, #tpu.memory_space<vmem>>, vector<16x32xbf16>
    tpu.vector_store %arg6[%c0_9, %c0_10], %14 {strides = array<i32>} : memref<16x32xbf16, #tpu.memory_space<vmem>>, vector<16x32xbf16>,
    return
  }
  func.func @transform_0(%arg0: i32) -> (i32, i32) {
    %c0_i32 = arith.constant 0 : i32
    %c0_i32_0 = arith.constant 0 : i32
    return %arg0, %c0_i32 : i32, i32
  }
  func.func @transform_1(%arg0: i32) -> (i32, i32) {
    %c0_i32 = arith.constant 0 : i32
    %c0_i32_0 = arith.constant 0 : i32
    %c0_i32_1 = arith.constant 0 : i32
    return %c0_i32, %c0_i32_0 : i32, i32
  }
  func.func @transform_2(%arg0: i32) -> (i32, i32) {
    %c0_i32 = arith.constant 0 : i32
    %c0_i32_0 = arith.constant 0 : i32
    %c0_i32_1 = arith.constant 0 : i32
    return %c0_i32, %c0_i32_0 : i32, i32
  }
  func.func @transform_3(%arg0: i32) -> (i32, i32) {
    %c0_i32 = arith.constant 0 : i32
    %c0_i32_0 = arith.constant 0 : i32
    return %arg0, %c0_i32 : i32, i32
  }
  func.func @transform_4(%arg0: i32) -> (i32, i32) {
    %c0_i32 = arith.constant 0 : i32
    %c0_i32_0 = arith.constant 0 : i32
    return %arg0, %c0_i32 : i32, i32
  }
  func.func @transform_5(%arg0: i32) -> (i32, i32) {
    %c0_i32 = arith.constant 0 : i32
    %c0_i32_0 = arith.constant 0 : i32
    return %arg0, %c0_i32 : i32, i32
  }
}

</mosaic_0001>

<llo_original>
// kernel: tpu_custom_call.1
$region0: #{tpu_custom_call.1}
  #allocation0 [shape = 'u32[]', space=smem, size = 0x4, offset = 0x4, fixed_abs, tag = 'smem constant byte address 0x4 - core index']
  #allocation1 [shape = 'u32[144,128]{1,0:T(1,128)}', space=vmem, size = 0x12000, scoped, tag = 'internal scratch']
  %s0 = inlined_call_operand.hbm [shape: f32[16,32], index: 0, kind: input, shape index: {}]
  %s1 = inlined_call_operand.hbm [shape: bf16[32,96], index: 1, kind: input, shape index: {}]
  %s2 = inlined_call_operand.vmem [shape: f32[1,96], index: 2, kind: input, shape index: {}]
  %s3 = inlined_call_operand.hbm [shape: bf16[16,32], index: 3, kind: output, shape index: {0}]
  %s4 = inlined_call_operand.hbm [shape: bf16[16,32], index: 4, kind: output, shape index: {1}]
  %s5 = inlined_call_operand.hbm [shape: bf16[16,32], index: 5, kind: output, shape index: {2}]
  %6 = xla_tuple %s3, %s4, %s5
  %s7 = sld [smem:[#allocation0]]
  $region46: #{tpu_custom_call.1} parent=0
    _
  %s9 = ssub.s32 1, %s7
  %s10 = scalar_select 0, %s9, %s7
  $region1: #{tpu_custom_call.1} parent=0
    #allocation2 [shape = 'u8[8192]{0}', space=vmem, size = 0x2000, scoped, tag = 'input window, operand 0, single buffered']
    #allocation3 [shape = 's32[1]{0}', space=sflag, size = 0x4, scoped, tag = 'scoped memory for tpu_custom_call.1']
    #allocation4 [shape = 's32[1]{0}', space=sflag, size = 0x4, scoped, tag = 'scoped memory for tpu_custom_call.1']
    #allocation5 [shape = 'u8[8192]{0}', space=vmem, size = 0x2000, scoped, tag = 'input window, operand 1, single buffered']
    #allocation6 [shape = 's32[1]{0}', space=sflag, size = 0x4, scoped, tag = 'scoped memory for tpu_custom_call.1']
    #allocation7 [shape = 'u8[4096]{0}', space=vmem, size = 0x1000, scoped, tag = 'output window, operand 0, single buffered']
    #allocation8 [shape = 'u8[4096]{0}', space=vmem, size = 0x1000, scoped, tag = 'output window, operand 1, single buffered']
    #allocation9 [shape = 's32[1]{0}', space=sflag, size = 0x4, scoped, tag = 'scoped memory for tpu_custom_call.1']
    #allocation10 [shape = 'u8[4096]{0}', space=vmem, size = 0x1000, scoped, tag = 'output window, operand 2, single buffered']
    %11 = vsyncpa [#allocation3], 0
    %12 = vsyncpa [#allocation6], 0
    %13 = vsyncpa [#allocation4], 0
    %14 = vsyncpa [#allocation9], 0
    // Predicated region
    $region2: #{tpu_custom_call.1} parent=1 // pred_check
      _
    $region3: #{tpu_custom_call.1} parent=1 // pred_check_branch
      %16 = sbr.rel (0) target = $region5
    $region4: #{tpu_custom_call.1} parent=1 // pred_region
      %s18 = ssub.s32 256, 256
      %19 = vsyncadd [#allocation3], %s18
      %s20 = sshll.u32 [#allocation2], 4
      %s21 = int_to_ptr.vmem [resolvable:$true] %s20
      %26 = dma.hbm_to_vmem [thread:$0]  %s0, 256, %s21, [#allocation3], 128, 128, 8
    $region5: #{tpu_custom_call.1} parent=1 // pred_fallthru
      _
    // Predicated region
    $region6: #{tpu_custom_call.1} parent=1 // pred_check
      _
    $region7: #{tpu_custom_call.1} parent=1 // pred_check_branch
      %28 = sbr.rel (0) target = $region9
    $region8: #{tpu_custom_call.1} parent=1 // pred_region
      %s30 = ssub.s32 256, 256
      %31 = vsyncadd [#allocation6], %s30
      %s32 = sshll.u32 [#allocation5], 4
      %s33 = int_to_ptr.vmem [resolvable:$true] %s32
      %38 = dma.hbm_to_vmem [thread:$0]  %s1, 256, %s33, [#allocation6], 64, 64, 4
    $region9: #{tpu_custom_call.1} parent=1 // pred_fallthru
      _
    // Predicated region
    $region10: #{tpu_custom_call.1} parent=1 // pred_check
      _
    $region11: #{tpu_custom_call.1} parent=1 // pred_check_branch
      %40 = sbr.rel (0) target = $region13
    $region12: #{tpu_custom_call.1} parent=1 // pred_region
      _
    $region13: #{tpu_custom_call.1} parent=1 // pred_fallthru
      _
    // Predicated region
    $region14: #{tpu_custom_call.1} parent=1 // pred_check
      _
    $region15: #{tpu_custom_call.1} parent=1 // pred_check_branch
      %42 = sbr.rel (0) target = $region17
    $region16: #{tpu_custom_call.1} parent=1 // pred_region
      %43 = dma.done [#allocation3], 256
    $region17: #{tpu_custom_call.1} parent=1 // pred_fallthru
      _
    // Predicated region
    $region18: #{tpu_custom_call.1} parent=1 // pred_check
      _
    $region19: #{tpu_custom_call.1} parent=1 // pred_check_branch
      %45 = sbr.rel (0) target = $region21
    $region20: #{tpu_custom_call.1} parent=1 // pred_region
      %46 = dma.done [#allocation6], 256
    $region21: #{tpu_custom_call.1} parent=1 // pred_fallthru
      _
    %v48 = vld [vmem:[#allocation2] sm:$0xff]
    %v49 = vld [vmem:[#allocation2 + $0x8] sm:$0xff]
    %v50 = vpack.c.bf16 %v49, %v48
    %v51 = vld [vmem:[#allocation5] sm:$0xf]
    %v52 = vld [vmem:[#allocation5 + $0x4] sm:$0xf]
    %v53 = vld [vmem:[#allocation5 + $0x8] sm:$0xf]
    %v54 = vld [vmem:[#allocation5 + $0xc] sm:$0xf]
    %v55 = vld [vmem:[%s2] sm:$0x1]
    %v57 = vlaneseq
    %v58 = vshrl.u32 %v57, 7
    %v59 = vsub.s32 0, %v58
    %v60 = vrot.slane %v55, %v59
    %v66 = vunpack.c.l.b16 %v51
    %v67 = vunpack.c.l.b16 %v52
    %v68 = vunpack.c.l.b16 %v53
    %v69 = vunpack.c.l.b16 %v54
    %v70 = vpack.c.b16 %v67, %v66
    %v71 = vpack.c.b16 %v69, %v68
    %vm74 = vcmask 261120
    %v76 = vsel %vm74, %v50, 0
    %78 = vmatprep.subr.bf16.mxu0 0
    %79 = vmatpush1.bf16.msra.mxu0 %v70
    %80 = vmatprep.subr.bf16.mxu0 0
    %81 = vmatpush1.bf16.msra.mxu0 %v71
    %82 = vmatprep.subr.bf16.mxu0 0
    %83 = vmatpush1.bf16.msra.mxu0 0
    %84 = vmatprep.subr.bf16.mxu0 0
    %85 = vmatpush1.bf16.msra.mxu0 0
    %86 = vmatprep.subr.bf16.mxu0 0
    %87 = vmatpush1.bf16.msra.mxu0 0
    %88 = vmatprep.subr.bf16.mxu0 0
    %89 = vmatpush1.bf16.msra.mxu0 0
    %90 = vmatprep.subr.bf16.mxu0 0
    %91 = vmatpush1.bf16.msra.mxu0 0
    %92 = vmatprep.subr.bf16.mxu0 0
    %93 = vmatpush1.bf16.msra.mxu0 0
    %94 = vmatprep.subr.bf16.mxu0 0
    %95 = vmatpush1.bf16.msra.mxu0 0
    %96 = vmatprep.subr.bf16.mxu0 0
    %97 = vmatpush1.bf16.msra.mxu0 0
    %98 = vmatprep.subr.bf16.mxu0 0
    %99 = vmatpush1.bf16.msra.mxu0 0
    %100 = vmatprep.subr.bf16.mxu0 0
    %101 = vmatpush1.bf16.msra.mxu0 0
    %102 = vmatprep.subr.bf16.mxu0 0
    %103 = vmatpush1.bf16.msra.mxu0 0
    %104 = vmatprep.subr.bf16.mxu0 0
    %105 = vmatpush1.bf16.msra.mxu0 0
    %106 = vmatprep.subr.bf16.mxu0 0
    %107 = vmatpush1.bf16.msra.mxu0 0
    %108 = vmatprep.subr.bf16.mxu0 0
    %109 = vmatpush1.bf16.msra.mxu0 0
    %110 = vmatprep.mubr.bf16.mxu0 0
    %111 = vmatmul.mubr.bf16.gmra.mrb[0].mxu0 %v76
    %v112 = vpop.f32.mrb[0].mxu0
    %v113 = vadd.f32 %v60, %v112
    %v114 = vpop.f32.mrb[0].mxu0
    %v115 = vpop.f32.mrb[0].mxu0
    %v116 = vadd.f32 %v60, %v115
    %v117 = vpop.f32.mrb[0].mxu0
    %118 = vdwg.mxu0
    %v119 = vpack.c.bf16 %v116, %v113
    %v121 = vunpack.c.l.b16 %v119
    %v122 = vunpack.c.h.b16 %v119
    %v123 = vpack.c.b16 %v121, %v121
    %v124 = vpack.c.b16 %v122, %v122
    %vm127 = vcmask 257024
    %128 = vst.msk [vmem:[#allocation7] sm:$0xf] %vm127, %v123
    %129 = vst.msk [vmem:[#allocation7 + $0x4] sm:$0xf] %vm127, %v124
    %130 = vrot.lane.b32.xlu0 %v123, 96
    %v131 = vpop.permute.xlu0 %130
    %132 = vrot.lane.b32.xlu0 %v124, 96
    %v133 = vpop.permute.xlu0 %132
    %136 = vst.msk [vmem:[#allocation8] sm:$0xf] %vm127, %v131
    %137 = vst.msk [vmem:[#allocation8 + $0x4] sm:$0xf] %vm127, %v133
    %138 = vrot.lane.b32.xlu0 %v123, 64
    %v139 = vpop.permute.xlu0 %138
    %140 = vrot.lane.b32.xlu0 %v124, 64
    %v141 = vpop.permute.xlu0 %140
    %144 = vst.msk [vmem:[#allocation10] sm:$0xf] %vm127, %v139
    %145 = vst.msk [vmem:[#allocation10 + $0x4] sm:$0xf] %vm127, %v141
    // Predicated region
    $region22: #{tpu_custom_call.1} parent=1 // pred_check
      _
    $region23: #{tpu_custom_call.1} parent=1 // pred_check_branch
      %147 = sbr.rel (0) target = $region25
    $region24: #{tpu_custom_call.1} parent=1 // pred_region
      %s149 = ssub.s32 128, 128
      %150 = vsyncadd [#allocation4], %s149
      %s151 = sshll.u32 [#allocation7], 4
      %s152 = int_to_ptr.vmem [resolvable:$true] %s151
      %157 = dma.vmem_to_hbm [thread:$0]  %s152, 128, %s3, [#allocation4], 64, 64, 4
    $region25: #{tpu_custom_call.1} parent=1 // pred_fallthru
      _
    // Predicated region
    $region26: #{tpu_custom_call.1} parent=1 // pred_check
      _
    $region27: #{tpu_custom_call.1} parent=1 // pred_check_branch
      %159 = sbr.rel (0) target = $region29
    $region28: #{tpu_custom_call.1} parent=1 // pred_region
      %s161 = ssub.s32 128, 128
      %162 = vsyncadd [#allocation9], %s161
      %s163 = sshll.u32 [#allocation8], 4
      %s164 = int_to_ptr.vmem [resolvable:$true] %s163
      %169 = dma.vmem_to_hbm [thread:$0]  %s164, 128, %s4, [#allocation9], 64, 64, 4
    $region29: #{tpu_custom_call.1} parent=1 // pred_fallthru
      _
    // Predicated region
    $region30: #{tpu_custom_call.1} parent=1 // pred_check
      _
    $region31: #{tpu_custom_call.1} parent=1 // pred_check_branch
      %171 = sbr.rel (0) target = $region33
    $region32: #{tpu_custom_call.1} parent=1 // pred_region
      %s173 = ssub.s32 128, 128
      %174 = vsyncadd [#allocation9], %s173
      %s175 = sshll.u32 [#allocation10], 4
      %s176 = int_to_ptr.vmem [resolvable:$true] %s175
      %181 = dma.vmem_to_hbm [thread:$0]  %s176, 128, %s5, [#allocation9], 64, 64, 4
    $region33: #{tpu_custom_call.1} parent=1 // pred_fallthru
      _
    // Predicated region
    $region34: #{tpu_custom_call.1} parent=1 // pred_check
      _
    $region35: #{tpu_custom_call.1} parent=1 // pred_check_branch
      %183 = sbr.rel (0) target = $region37
    $region36: #{tpu_custom_call.1} parent=1 // pred_region
      %184 = dma.done [#allocation4], 128
    $region37: #{tpu_custom_call.1} parent=1 // pred_fallthru
      _
    // Predicated region
    $region38: #{tpu_custom_call.1} parent=1 // pred_check
      _
    $region39: #{tpu_custom_call.1} parent=1 // pred_check_branch
      %186 = sbr.rel (0) target = $region41
    $region40: #{tpu_custom_call.1} parent=1 // pred_region
      %187 = dma.done [#allocation9], 128
    $region41: #{tpu_custom_call.1} parent=1 // pred_fallthru
      _
    // Predicated region
    $region42: #{tpu_custom_call.1} parent=1 // pred_check
      _
    $region43: #{tpu_custom_call.1} parent=1 // pred_check_branch
      %189 = sbr.rel (0) target = $region45
    $region44: #{tpu_custom_call.1} parent=1 // pred_region
      %190 = dma.done [#allocation9], 128
    $region45: #{tpu_custom_call.1} parent=1 // pred_fallthru
      _
    %191 = vsyncpa [#allocation3], 1
    %192 = vsyncpa [#allocation6], 1
    %193 = vsyncpa [#allocation4], 1
    %194 = vsyncpa [#allocation9], 1

</llo_original>
